<compile_context>
chip_gen: v7x
topology: tpu7x:2x2x1
jax: 0.10.0
libtpu: 0.0.40
codegen_flags: <defaults>
</compile_context>

<pallas_src>
import functools

import jax
import jax.numpy as jnp
from jax import lax
from jax.experimental import pallas as pl
from jax.experimental.pallas import tpu as pltpu


def _round_up(x: int, m: int) -> int:
    return ((x + m - 1) // m) * m


def _cdiv(a: int, b: int) -> int:
    return (a + b - 1) // b


def _readout_kernel(gmin_ref, gmax_ref, aux_ref, batch_ref, x_ref, out_ref,
                    *scratch, mode: str, n_valid, tn_chunk: int):
    k = pl.program_id(1)                 # node-tile index (reduction axis)
    nk = pl.num_programs(1)
    acc_ref = scratch[0] if scratch else out_ref   # f32 input -> accumulate into out
    Gp = acc_ref.shape[0]
    TN, TF = x_ref.shape

    # --- init resident accumulator on the first node tile (per feature block) ------
    @pl.when(k == 0)
    def _():
        if mode == "max":
            acc_ref[...] = jnp.full_like(acc_ref, -jnp.inf)
        else:
            acc_ref[...] = jnp.zeros_like(acc_ref)

    b = batch_ref[...]                                        # (1, TN) int32, pad = -1

    if mode in ("mean", "sum"):
        x = x_ref[...]                                        # (TN, TF), input dtype
        if n_valid is not None:
            # Partial last tile: OOB rows hold garbage (0 * NaN would poison the MXU
            # accumulation), so zero them.  Pure VPU select, negligible vs. DMA.
            row = k * TN + lax.broadcasted_iota(jnp.int32, (TN, TF), 0)
            x = jnp.where(row < n_valid, x, jnp.zeros_like(x))
        gids = lax.broadcasted_iota(jnp.int32, (Gp, TN), 0)
        onehot = (jnp.broadcast_to(b, (Gp, TN)) == gids).astype(x.dtype)
        acc_ref[...] += jnp.dot(onehot, x, preferred_element_type=jnp.float32)
    else:  # max: only graphs present in this tile (scalar-prefetched range)
        gmin = gmin_ref[k]
        gmax = gmax_ref[k]
        c_lo = gmin // 8
        c_hi = gmax // 8 + 1
        n_inner = TN // tn_chunk

        def chunk_body(c, carry):
            g0 = pl.multiple_of(c * 8, 8)                     # sublane-aligned graph row
            gids = g0 + lax.broadcasted_iota(jnp.int32, (8, tn_chunk), 0)

            def node_body(t, carry2):
                n0 = pl.multiple_of(t * tn_chunk, tn_chunk)
                bseg = batch_ref[:, pl.ds(n0, tn_chunk)]                   # (1, TNC)
                m = jnp.broadcast_to(bseg, (8, tn_chunk)) == gids          # (8, TNC)
                xseg = x_ref[pl.ds(n0, tn_chunk), :].astype(jnp.float32)   # (TNC, TF)
                masked = jnp.where(m[:, :, None], xseg[None, :, :], -jnp.inf)
                part = masked.max(axis=1)                                  # (8, TF)
                cur = acc_ref[pl.ds(g0, 8), :]
                acc_ref[pl.ds(g0, 8), :] = jnp.maximum(cur, part)
                return carry2

            if n_inner == 1:
                node_body(0, 0)
            else:
                lax.fori_loop(0, n_inner, node_body, 0)
            return carry

        lax.fori_loop(c_lo, c_hi, chunk_body, 0)

    # --- finalize on the last node tile ---------------------------------------------
    @pl.when(k == nk - 1)
    def _():
        if mode == "sum":
            out_ref[...] = acc_ref[...].astype(out_ref.dtype)
        elif mode == "mean":
            # aux holds 1/max(count, 1), precomputed exactly in the wrapper.
            out_ref[...] = (acc_ref[...] * aux_ref[...]).astype(out_ref.dtype)
        else:
            # aux holds counts; empty graphs -> 0 (matches PyG scatter semantics).
            out_ref[...] = jnp.where(aux_ref[...] > 0.0, acc_ref[...],
                                     0.0).astype(out_ref.dtype)


def graph_readout(node_emb: jax.Array, batch: jax.Array, num_graphs: int,
                  mode: str = "mean", max_tile_nodes: int | None = None) -> jax.Array:
    """Pallas equivalent of GraphReadout(mode)(node_emb, batch)."""
    if mode not in ("mean", "sum", "max"):
        raise ValueError(f"Unknown pooling mode: {mode}")
    N, F = node_emb.shape
    dtype = node_emb.dtype
    itemsize = jnp.dtype(dtype).itemsize
    batch_i32 = batch.astype(jnp.int32)

    Gp = _round_up(max(num_graphs, 1), 8)          # sublane-aligned graph rows

    # --- feature split across TensorCores (v7x has 2 TCs; 1 on v5e/v6e) -------------
    try:
        kind = jax.devices()[0].device_kind.lower()
    except Exception:
        kind = ""
    nF = 2 if ("v7" in kind and F >= 256 and F % 256 == 0) else 1
    TF = F // nF
    TFp = _round_up(TF, 128)

    # --- node-tile size from a ~2 MiB streamed-block byte budget ---------------------
    if N <= 128:
        TN = _round_up(max(N, 1), 8)
    else:
        rows = (2 << 20) // (TFp * itemsize)
        rows = max(128, (rows // 128) * 128)
        TN = min(4096, rows, _round_up(N, 128))
    if mode != "max" and TN > 128:
        # Bound the (Gp, TN) one-hot temporary for very large graph counts.
        cap = max(128, (((8 << 20) // (Gp * 4)) // 128) * 128)
        TN = min(TN, cap)
    if max_tile_nodes is not None:                 # test / tuning override
        mt = max(8, int(max_tile_nodes))
        mt = (mt // 128) * 128 if mt > 128 else (mt // 8) * 8
        TN = min(TN, mt)
    n_tiles = _cdiv(N, TN)
    if n_tiles > 1 and TN % 128 != 0:              # lane rule for the (1, TN) batch block
        TN = max(128, (TN // 128) * 128)
        n_tiles = _cdiv(N, TN)
    Np = n_tiles * TN
    TNC = TN if TN <= 128 else 128                 # max-mode node chunk (divides TN)
    padded_rows = Np != N

    # --- tiny side inputs: padded batch ids, per-graph aux, per-tile graph range -----
    b_flat = jnp.full((Np,), -1, jnp.int32).at[:N].set(batch_i32)
    b_row = b_flat.reshape(1, Np)

    if mode == "sum":
        aux = jnp.zeros((Gp, 1), jnp.float32)
    else:
        # Counts computed once here (exact up to 2^24 nodes/graph in f32).
        cnt = jax.ops.segment_sum(jnp.ones((N,), jnp.float32), batch_i32,
                                  num_segments=num_graphs)
        vals = (1.0 / jnp.maximum(cnt, 1.0)) if mode == "mean" else cnt
        aux = jnp.zeros((Gp, 1), jnp.float32).at[:num_graphs, 0].set(vals)

    if mode == "max":
        bt = b_flat.reshape(n_tiles, TN)
        g_hi = max(num_graphs - 1, 0)
        gmax_t = jnp.clip(jnp.max(bt, axis=1), 0, g_hi).astype(jnp.int32)
        gmin_t = jnp.clip(jnp.min(jnp.where(bt >= 0, bt, num_graphs), axis=1),
                          0, g_hi).astype(jnp.int32)
    else:
        gmin_t = jnp.zeros((n_tiles,), jnp.int32)
        gmax_t = jnp.zeros((n_tiles,), jnp.int32)

    use_out_as_acc = dtype == jnp.float32
    scratch_shapes = [] if use_out_as_acc else [pltpu.VMEM((Gp, TF), jnp.float32)]

    kernel = functools.partial(_readout_kernel, mode=mode,
                               n_valid=(N if padded_rows else None), tn_chunk=TNC)

    # --- VMEM budget (cap at 75% of physical VMEM, never the full 64 MiB on v7x) ----
    est = (2 * TN * TFp * itemsize                         # streamed node_emb (x2 buf)
           + 2 * 8 * TN * 4                                # batch-id blocks
           + 2 * Gp * 128 * 4                              # aux block
           + 2 * Gp * TFp * max(itemsize, 4)               # resident output block
           + (0 if use_out_as_acc else Gp * TFp * 4)       # f32 accumulator scratch
           + (2 * Gp * TN * 4 if mode != "max"             # one-hot mask temporaries
              else 8 * TNC * TFp * 4 + 2 * 8 * TFp * 4))   # max-mode masked temporaries
    try:
        info = pltpu.get_tpu_info()
        cap = int(getattr(info, "vmem_capacity_bytes", 64 * 1024 * 1024)) * 3 // 4
    except Exception:
        cap = 48 * 1024 * 1024
    cap = max(cap, 32 * 1024 * 1024)
    vmem_limit = int(min(cap, max(32 * 1024 * 1024, 2 * est)))

    cost = pl.CostEstimate(
        flops=2 * Gp * Np * _round_up(F, 128),
        transcendentals=0,
        bytes_accessed=N * F * itemsize + Gp * F * itemsize + Np * 4,
    )

    out = pl.pallas_call(
        kernel,
        out_shape=jax.ShapeDtypeStruct((Gp, F), dtype),
        grid_spec=pltpu.PrefetchScalarGridSpec(
            num_scalar_prefetch=2,                         # per-tile gmin / gmax (SMEM)
            grid=(nF, n_tiles),
            in_specs=[
                pl.BlockSpec((Gp, 1), lambda f, k, *_: (0, 0)),   # aux (1/count or count)
                pl.BlockSpec((1, TN), lambda f, k, *_: (0, k)),   # batch ids per tile
                pl.BlockSpec((TN, TF), lambda f, k, *_: (k, f)),  # streamed node_emb tile
            ],
            out_specs=pl.BlockSpec((Gp, TF), lambda f, k, *_: (0, f)),
            scratch_shapes=scratch_shapes,
        ),
        compiler_params=pltpu.CompilerParams(
            dimension_semantics=("parallel", "arbitrary"),   # F parallel, N reduction
            vmem_limit_bytes=vmem_limit,
        ),
        cost_estimate=cost,
    )(gmin_t, gmax_t, aux, b_row, node_emb)

    return out[:num_graphs, :]


if __name__ == "__main__":
    key = jax.random.PRNGKey(0)

    def reference(x, b, g, mode):
        seg_sum = jax.ops.segment_sum(x, b, num_segments=g)
        cnt = jax.ops.segment_sum(jnp.ones((x.shape[0], 1), jnp.float32), b,
                                  num_segments=g)
        if mode == "sum":
            return seg_sum
        if mode == "mean":
            return seg_sum / jnp.maximum(cnt, 1.0)
        mx = jax.ops.segment_max(x, b, num_segments=g)
        return jnp.where(cnt > 0.0, mx, 0.0)   # empty graphs -> 0

    # Case 1: tiny single-tile case (16 nodes, 32 features, 4 graphs of 4 nodes).
    N1, F1, G1 = 16, 32, 4
    k1, k2 = jax.random.split(key)
    x1 = jax.random.normal(k1, (N1, F1), dtype=jnp.float32)
    b1 = jnp.repeat(jnp.arange(G1, dtype=jnp.int32), N1 // G1)

    # Case 2: multi-tile with a partial last tile, uneven graph sizes incl. one empty graph.
    N2, F2, G2 = 200, 64, 7
    x2 = jax.random.normal(k2, (N2, F2), dtype=jnp.float32)
    sizes = [40, 23, 57, 0, 31, 17, 32]   # sums to 200; graph 3 is empty
    b2 = jnp.concatenate([jnp.full((s,), i, jnp.int32)
                          for i, s in enumerate(sizes) if s > 0])

    for mode in ("mean", "sum", "max"):
        out1 = jax.block_until_ready(graph_readout(x1, b1, G1, mode=mode))
        ref1 = reference(x1, b1, G1, mode)
        assert out1.shape == (G1, F1)
        assert jnp.allclose(out1, ref1, atol=1e-5, rtol=1e-5), f"case1 {mode}"

        out2 = jax.block_until_ready(
            graph_readout(x2, b2, G2, mode=mode, max_tile_nodes=128))
        ref2 = reference(x2, b2, G2, mode)
        assert out2.shape == (G2, F2)
        assert jnp.allclose(out2, ref2, atol=1e-5, rtol=1e-5), f"case2 {mode}"

    print("KERNEL_OK")
</pallas_src>

<mosaic_0001>
module attributes {stable_mosaic.version = 11 : i64} {
  func.func @_readout_kernel(%arg0: i32, %arg1: i32, %arg2: memref<1xi32, #tpu.memory_space<smem>>, %arg3: memref<1xi32, #tpu.memory_space<smem>>, %arg4: memref<8x1xf32, #tpu.memory_space<vmem>>, %arg5: memref<1x16xi32, #tpu.memory_space<vmem>>, %arg6: memref<16x32xf32, #tpu.memory_space<vmem>>, %arg7: memref<8x32xf32, #tpu.memory_space<vmem>>) attributes {dimension_semantics = [#tpu.dimension_semantics<parallel>, #tpu.dimension_semantics<arbitrary>], iteration_bounds = array<i64: 1, 1>, scalar_prefetch = 2 : i64, scratch_operands = 0 : i64, tpu.core_type = #tpu.core_type<tc>, window_params = [{pipeline_mode = #tpu.pipeline_mode<synchronous>, transform_indices = @transform_0, window_bounds = array<i64: 8, 1>}, {transform_indices = @transform_1, window_bounds = array<i64: 1, 16>}, {transform_indices = @transform_2, window_bounds = array<i64: 16, 32>}, {transform_indices = @transform_3, window_bounds = array<i64: 8, 32>}]} {
    %c0_i32 = arith.constant 0 : i32
    %0 = arith.cmpi eq, %arg1, %c0_i32 : i32
    %1 = arith.extui %0 : i1 to i32
    %c0_i32_0 = arith.constant 0 : i32
    %2 = arith.cmpi ne, %1, %c0_i32_0 : i32
    scf.if %2 {
      %cst_10 = arith.constant 0.000000e+00 : f32
      %18 = vector.broadcast %cst_10 : f32 to vector<8x32xf32>
      %c0_11 = arith.constant 0 : index
      %c0_12 = arith.constant 0 : index
      %19 = vector.load %arg7[%c0_11, %c0_12] : memref<8x32xf32, #tpu.memory_space<vmem>>, vector<8x32xf32>
      tpu.vector_store %arg7[%c0_11, %c0_12], %18 {strides = array<i32>} : memref<8x32xf32, #tpu.memory_space<vmem>>, vector<8x32xf32>,
    } else {
    }
    %c0 = arith.constant 0 : index
    %c0_1 = arith.constant 0 : index
    %3 = vector.load %arg5[%c0, %c0_1] : memref<1x16xi32, #tpu.memory_space<vmem>>, vector<1x16xi32>
    %c0_2 = arith.constant 0 : index
    %c0_3 = arith.constant 0 : index
    %4 = vector.load %arg6[%c0_2, %c0_3] : memref<16x32xf32, #tpu.memory_space<vmem>>, vector<16x32xf32>
    %5 = tpu.iota {dimensions = array<i32: 0>} : vector<8x16xi32>
    %6 = vector.shape_cast %3 : vector<1x16xi32> to vector<1x16xi32>
    %7 = vector.broadcast %6 : vector<1x16xi32> to vector<8x16xi32>
    %8 = arith.cmpi eq, %7, %5 : vector<8x16xi32>
    %9 = arith.extui %8 : vector<8x16xi1> to vector<8x16xi32>
    %10 = arith.sitofp %9 : vector<8x16xi32> to vector<8x16xf32>
    %c0_4 = arith.constant 0 : index
    %c0_5 = arith.constant 0 : index
    %11 = vector.load %arg7[%c0_4, %c0_5] : memref<8x32xf32, #tpu.memory_space<vmem>>, vector<8x32xf32>
    %cst = arith.constant dense<0.000000e+00> : vector<8x32xf32>
    %12 = tpu.matmul %10, %4, %cst {dimension_numbers = #tpu.dot_dimension_numbers<[1], [0], [0], [1], [0, 0, 1, 1], [], []>} : vector<8x16xf32>, vector<16x32xf32>, vector<8x32xf32> -> vector<8x32xf32>
    %13 = arith.addf %11, %12 : vector<8x32xf32>
    %c0_6 = arith.constant 0 : index
    %c0_7 = arith.constant 0 : index
    %14 = vector.load %arg7[%c0_6, %c0_7] : memref<8x32xf32, #tpu.memory_space<vmem>>, vector<8x32xf32>
    tpu.vector_store %arg7[%c0_6, %c0_7], %13 {strides = array<i32>} : memref<8x32xf32, #tpu.memory_space<vmem>>, vector<8x32xf32>,
    %c0_i32_8 = arith.constant 0 : i32
    %15 = arith.cmpi eq, %arg1, %c0_i32_8 : i32
    %16 = arith.extui %15 : i1 to i32
    %c0_i32_9 = arith.constant 0 : i32
    %17 = arith.cmpi ne, %16, %c0_i32_9 : i32
    scf.if %17 {
      %c0_10 = arith.constant 0 : index
      %c0_11 = arith.constant 0 : index
      %18 = vector.load %arg7[%c0_10, %c0_11] : memref<8x32xf32, #tpu.memory_space<vmem>>, vector<8x32xf32>
      %c0_12 = arith.constant 0 : index
      %c0_13 = arith.constant 0 : index
      %19 = vector.load %arg4[%c0_12, %c0_13] : memref<8x1xf32, #tpu.memory_space<vmem>>, vector<8x1xf32>
      %20 = vector.broadcast %19 : vector<8x1xf32> to vector<8x32xf32>
      %21 = arith.mulf %18, %20 : vector<8x32xf32>
      %c0_14 = arith.constant 0 : index
      %c0_15 = arith.constant 0 : index
      %22 = vector.load %arg7[%c0_14, %c0_15] : memref<8x32xf32, #tpu.memory_space<vmem>>, vector<8x32xf32>
      tpu.vector_store %arg7[%c0_14, %c0_15], %21 {strides = array<i32>} : memref<8x32xf32, #tpu.memory_space<vmem>>, vector<8x32xf32>,
    } else {
    }
    return
  }
  func.func @transform_0(%arg0: i32, %arg1: i32, %arg2: memref<1xi32, #tpu.memory_space<smem>>, %arg3: memref<1xi32, #tpu.memory_space<smem>>) -> (i32, i32) {
    %c0_i32 = arith.constant 0 : i32
    %c0_i32_0 = arith.constant 0 : i32
    %c0_i32_1 = arith.constant 0 : i32
    return %c0_i32, %c0_i32_0 : i32, i32
  }
  func.func @transform_1(%arg0: i32, %arg1: i32, %arg2: memref<1xi32, #tpu.memory_space<smem>>, %arg3: memref<1xi32, #tpu.memory_space<smem>>) -> (i32, i32) {
    %c0_i32 = arith.constant 0 : i32
    %c0_i32_0 = arith.constant 0 : i32
    return %c0_i32, %arg1 : i32, i32
  }
  func.func @transform_2(%arg0: i32, %arg1: i32, %arg2: memref<1xi32, #tpu.memory_space<smem>>, %arg3: memref<1xi32, #tpu.memory_space<smem>>) -> (i32, i32) {
    %c0_i32 = arith.constant 0 : i32
    return %arg1, %arg0 : i32, i32
  }
  func.func @transform_3(%arg0: i32, %arg1: i32, %arg2: memref<1xi32, #tpu.memory_space<smem>>, %arg3: memref<1xi32, #tpu.memory_space<smem>>) -> (i32, i32) {
    %c0_i32 = arith.constant 0 : i32
    %c0_i32_0 = arith.constant 0 : i32
    return %c0_i32, %arg0 : i32, i32
  }
}

</mosaic_0001>

<llo_original>
// kernel: tpu_custom_call.1
$region0: #{tpu_custom_call.1}
  #allocation0 [shape = 'u32[]', space=smem, size = 0x4, offset = 0x4, fixed_abs, tag = 'smem constant byte address 0x4 - core index']
  #allocation1 [shape = 'u32[144,128]{1,0:T(1,128)}', space=vmem, size = 0x12000, scoped, tag = 'internal scratch']
  #allocation2 [shape = 's32[1]{0}', space=sflag, size = 0x4, scoped, tag = 'scoped memory for tpu_custom_call.1']
  #allocation3 [shape = 's32[1]{0:T(128)S(6)}', space=smem, size = 0x200, scoped, tag = 'prefetched SMEM operand 0']
  #allocation4 [shape = 's32[1]{0:T(128)S(6)}', space=smem, size = 0x200, scoped, tag = 'prefetched SMEM operand 1']
  %s0 = inlined_call_operand.<no memory space> [shape: s32[1], index: 0, kind: input, shape index: {}]
  %s1 = inlined_call_operand.<no memory space> [shape: s32[1], index: 1, kind: input, shape index: {}]
  %s2 = inlined_call_operand.vmem [shape: f32[8,1], index: 2, kind: input, shape index: {}]
  %s3 = inlined_call_operand.vmem [shape: s32[1,16], index: 3, kind: input, shape index: {}]
  %s4 = inlined_call_operand.vmem [shape: f32[16,32], index: 4, kind: input, shape index: {}]
  %s5 = inlined_call_operand.hbm [shape: f32[8,32], index: 5, kind: output, shape index: {}]
  %s6 = sld [smem:[#allocation0]]
  $region30: #{tpu_custom_call.1} parent=0
    _
  %s8 = ssub.s32 1, %s6
  %s9 = scalar_select 0, %s8, %s6
  %10 = sst [smem:[#allocation3]] %s0
  %11 = sst [smem:[#allocation4]] %s1
  $region1: #{tpu_custom_call.1} parent=0
    #allocation5 [shape = 'u8[4096]{0}', space=vmem, size = 0x1000, scoped, tag = 'output window, operand 0, single buffered']
    #allocation6 [shape = 's32[1]{0}', space=sflag, size = 0x4, scoped, tag = 'scoped memory for tpu_custom_call.1']
    %12 = vsyncpa [#allocation6], 0
    // Predicated region
    $region2: #{tpu_custom_call.1} parent=1 // pred_check
      _
    $region3: #{tpu_custom_call.1} parent=1 // pred_check_branch
      %14 = sbr.rel (0) target = $region5
    $region4: #{tpu_custom_call.1} parent=1 // pred_region
      _
    $region5: #{tpu_custom_call.1} parent=1 // pred_fallthru
      _
    // Predicated region
    $region6: #{tpu_custom_call.1} parent=1 // pred_check
      _
    $region7: #{tpu_custom_call.1} parent=1 // pred_check_branch
      %16 = sbr.rel (0) target = $region9
    $region8: #{tpu_custom_call.1} parent=1 // pred_region
      _
    $region9: #{tpu_custom_call.1} parent=1 // pred_fallthru
      _
    // Predicated region
    $region10: #{tpu_custom_call.1} parent=1 // pred_check
      _
    $region11: #{tpu_custom_call.1} parent=1 // pred_check_branch
      %18 = sbr.rel (0) target = $region13
    $region12: #{tpu_custom_call.1} parent=1 // pred_region
      _
    $region13: #{tpu_custom_call.1} parent=1 // pred_fallthru
      _
    %p19 = scmp.eq.s32.totalorder 0, 0
    // Predicated region
    $region14: #{tpu_custom_call.1} parent=1 // pred_check
      %p20 = pneg %p19
    $region15: #{tpu_custom_call.1} parent=1 // pred_check_branch
      %22 = sbr.rel (%p20) target = $region17
    $region16: #{tpu_custom_call.1} parent=1 // pred_region
      %vm23 = vcmask 261120
      %24 = vst.msk [vmem:[#allocation5] sm:$0xff] %vm23, 0.0
    $region17: #{tpu_custom_call.1} parent=1 // pred_fallthru
      _
    %v25 = vld [vmem:[%s3] sm:$0x1]
    %v26 = vld [vmem:[%s4] sm:$0xff]
    %v27 = vld [vmem:[%s4 + $0x8] sm:$0xff]
    %v28 = vlaneseq
    %v29 = vshrl.u32 %v28, 7
    %v30 = vlaneseq
    %v31 = vshrl.u32 %v30, 7
    %v32 = vsub.s32 0, %v31
    %v33 = vrot.slane %v25, %v32
    %vm34 = vcmp.eq.s32.totalorder %v33, %v29
    %v35 = vsel %vm34, 1, 0
    %v36 = vcvt.s32.f32 %v35
    %v37 = vld [vmem:[#allocation5] sm:$0xff]
    %vm38 = vcmask 130048
    %v40 = vsel %vm38, %v36, 0
    %42 = vmatprep.subr.mxu0 0.0
    %43 = vmatpush1.msra.mxu0 %v26
    %44 = vmatprep.subr.mxu0 0.0
    %45 = vmatpush1.msra.mxu0 %v27
    %46 = vmatprep.subr.mxu0 0.0
    %47 = vmatpush1.msra.mxu0 0.0
    %48 = vmatprep.subr.mxu0 0.0
    %49 = vmatpush1.msra.mxu0 0.0
    %50 = vmatprep.subr.mxu0 0.0
    %51 = vmatpush1.msra.mxu0 0.0
    %52 = vmatprep.subr.mxu0 0.0
    %53 = vmatpush1.msra.mxu0 0.0
    %54 = vmatprep.subr.mxu0 0.0
    %55 = vmatpush1.msra.mxu0 0.0
    %56 = vmatprep.subr.mxu0 0.0
    %57 = vmatpush1.msra.mxu0 0.0
    %58 = vmatprep.subr.mxu0 0.0
    %59 = vmatpush1.msra.mxu0 0.0
    %60 = vmatprep.subr.mxu0 0.0
    %61 = vmatpush1.msra.mxu0 0.0
    %62 = vmatprep.subr.mxu0 0.0
    %63 = vmatpush1.msra.mxu0 0.0
    %64 = vmatprep.subr.mxu0 0.0
    %65 = vmatpush1.msra.mxu0 0.0
    %66 = vmatprep.subr.mxu0 0.0
    %67 = vmatpush1.msra.mxu0 0.0
    %68 = vmatprep.subr.mxu0 0.0
    %69 = vmatpush1.msra.mxu0 0.0
    %70 = vmatprep.subr.mxu0 0.0
    %71 = vmatpush1.msra.mxu0 0.0
    %72 = vmatprep.subr.mxu0 0.0
    %73 = vmatpush1.msra.mxu0 0.0
    %74 = vmatprep.subr.mxu0 0.0
    %75 = vmatpush1.msra.mxu0 0.0
    %76 = vmatprep.subr.mxu0 0.0
    %77 = vmatpush1.msra.mxu0 0.0
    %78 = vmatprep.subr.mxu0 0.0
    %79 = vmatpush1.msra.mxu0 0.0
    %80 = vmatprep.subr.mxu0 0.0
    %81 = vmatpush1.msra.mxu0 0.0
    %82 = vmatprep.subr.mxu0 0.0
    %83 = vmatpush1.msra.mxu0 0.0
    %84 = vmatprep.subr.mxu0 0.0
    %85 = vmatpush1.msra.mxu0 0.0
    %86 = vmatprep.subr.mxu0 0.0
    %87 = vmatpush1.msra.mxu0 0.0
    %88 = vmatprep.subr.mxu0 0.0
    %89 = vmatpush1.msra.mxu0 0.0
    %90 = vmatprep.subr.mxu0 0.0
    %91 = vmatpush1.msra.mxu0 0.0
    %92 = vmatprep.subr.mxu0 0.0
    %93 = vmatpush1.msra.mxu0 0.0
    %94 = vmatprep.subr.mxu0 0.0
    %95 = vmatpush1.msra.mxu0 0.0
    %96 = vmatprep.subr.mxu0 0.0
    %97 = vmatpush1.msra.mxu0 0.0
    %98 = vmatprep.subr.mxu0 0.0
    %99 = vmatpush1.msra.mxu0 0.0
    %100 = vmatprep.subr.mxu0 0.0
    %101 = vmatpush1.msra.mxu0 0.0
    %102 = vmatprep.subr.mxu0 0.0
    %103 = vmatpush1.msra.mxu0 0.0
    %104 = vmatprep.subr.mxu0 0.0
    %105 = vmatpush1.msra.mxu0 0.0
    %106 = vmatprep.mubr.f32.mxu0 0.0
    %107 = vmatmul.mubr.f32.gmra.mrb[0].mxu0 %v40
    %v108 = vpop.f32.mrb[0].mxu0
    %v109 = vadd.f32 0.0, %v108
    %v110 = vpop.f32.mrb[0].mxu0
    %111 = vdwg.mxu0
    %v112 = vadd.f32 %v37, %v109
    %vm113 = vcmask 261120
    %114 = vst.msk [vmem:[#allocation5] sm:$0xff] %vm113, %v112
    // Predicated region
    $region18: #{tpu_custom_call.1} parent=1 // pred_check
      %p115 = pneg %p19
    $region19: #{tpu_custom_call.1} parent=1 // pred_check_branch
      %117 = sbr.rel (%p115) target = $region21
    $region20: #{tpu_custom_call.1} parent=1 // pred_region
      %v118 = vld [vmem:[#allocation5] sm:$0xff]
      %v119 = vld [vmem:[%s2] sm:$0xff]
      %121 = vset.pattern.permute.xlu0 0
      %122 = vperm.xlu0 %121, %v119
      %v123 = vpop.permute.xlu0 %122
      %v125 = vmul.f32 %v118, %v123
      %126 = vst.msk [vmem:[#allocation5] sm:$0xff] %vm113, %v125
    $region21: #{tpu_custom_call.1} parent=1 // pred_fallthru
      _
    // Predicated region
    $region22: #{tpu_custom_call.1} parent=1 // pred_check
      _
    $region23: #{tpu_custom_call.1} parent=1 // pred_check_branch
      %128 = sbr.rel (0) target = $region25
    $region24: #{tpu_custom_call.1} parent=1 // pred_region
      %s130 = ssub.s32 128, 128
      %131 = vsyncadd [#allocation6], %s130
      %s133 = sshll.u32 [#allocation5], 4
      %s134 = int_to_ptr.vmem [resolvable:$true] %s133
      %136 = dma.vmem_to_hbm [thread:$0]  %s134, 128, %s5, [#allocation6]
    $region25: #{tpu_custom_call.1} parent=1 // pred_fallthru
      _
    // Predicated region
    $region26: #{tpu_custom_call.1} parent=1 // pred_check
      _
    $region27: #{tpu_custom_call.1} parent=1 // pred_check_branch
      %138 = sbr.rel (0) target = $region29
    $region28: #{tpu_custom_call.1} parent=1 // pred_region
      %139 = dma.done [#allocation6], 128
    $region29: #{tpu_custom_call.1} parent=1 // pred_fallthru
      _
    %140 = vsyncpa [#allocation6], 1

</llo_original>
